<compile_context>
chip_gen: v7x
topology: tpu7x:2x2x1
jax: 0.10.0
libtpu: 0.0.40
codegen_flags: <defaults>
</compile_context>

<pallas_src>
import functools

import numpy as np
import jax
import jax.numpy as jnp
from jax import lax
from jax.experimental import pallas as pl
from jax.experimental.pallas import tpu as pltpu

VMEM = pltpu.MemorySpace.VMEM


def _vspec():
    return pl.BlockSpec(memory_space=VMEM)


def _round_up(n, m):
    return ((n + m - 1) // m) * m


def _pad_rows(x, n_pad):
    n = x.shape[0]
    if n == n_pad:
        return x
    return jnp.pad(x, ((0, n_pad - n), (0, 0)))


# ---------------------------------------------------------------------------
# Kernel 1: hoisted bulk input projections.
#   xproj = X @ [W_i|W_o|W_u|W_f] + [b_i|b_o|b_u|b_f]     (one 4H=128-lane tile)
# ---------------------------------------------------------------------------
def _input_proj_kernel(x_ref, w_ref, b_ref, out_ref):
    x = x_ref[...].astype(jnp.bfloat16)          # activations cast in-kernel
    out_ref[...] = (jnp.dot(x, w_ref[...], preferred_element_type=jnp.float32)
                    + b_ref[...])


def input_projections(x, w_iouf, b_iouf):
    n, din = x.shape
    four_h = w_iouf.shape[1]
    tm = 512 if n > 512 else _round_up(n, 8)     # big row tiles (HBM roofline)
    n_pad = _round_up(n, tm)
    x_p = _pad_rows(x, n_pad)
    return pl.pallas_call(
        _input_proj_kernel,
        out_shape=jax.ShapeDtypeStruct((n_pad, four_h), jnp.float32),
        grid=(n_pad // tm,),
        in_specs=[pl.BlockSpec((tm, din), lambda i: (i, 0)),
                  pl.BlockSpec((din, four_h), lambda i: (0, 0)),
                  pl.BlockSpec((1, four_h), lambda i: (0, 0))],
        out_specs=pl.BlockSpec((tm, four_h), lambda i: (i, 0)),
        compiler_params=pltpu.CompilerParams(
            dimension_semantics=("parallel",),
            vmem_limit_bytes=32 * 1024 * 1024),
    )(x_p, w_iouf, b_iouf)


# ---------------------------------------------------------------------------
# Kernel 2: fully fused TreeLSTM layer.
#   Grid over levels; h (output ref) and c (scratch) stay resident in VMEM.
#   Per-level index tables live in SMEM via scalar prefetch and drive
#   in-kernel gathers, an index-driven scatter-add segment sum, and the
#   scatter of updated h/c rows back into the resident state.
# ---------------------------------------------------------------------------
def _tree_layer_kernel(nidx_ref, cidx_ref, pglob_ref, ppos_ref,
                       ncnt_ref, ecnt_ref,
                       xproj_ref, u_iou_ref, u_f_ref,
                       h_ref,
                       c_ref, chb_ref, ccb_ref, xfb_ref, fcb_ref,
                       hs_ref, cs_ref, xpb_ref, hn_ref, cn_ref, *, hid):
    lvl = pl.program_id(0)

    @pl.when(lvl == 0)
    def _leaves():
        # Leaf formula applied to every row; internal-node rows are
        # overwritten at their own level before any read (children are always
        # strictly below their parent's level).
        xp = xproj_ref[...]
        i = jax.nn.sigmoid(xp[:, 0 * hid:1 * hid])
        o = jax.nn.sigmoid(xp[:, 1 * hid:2 * hid])
        u = jnp.tanh(xp[:, 2 * hid:3 * hid])
        c0 = i * u
        c_ref[...] = c0
        h_ref[...] = o * jnp.tanh(c0)

    @pl.when(lvl > 0)
    def _internal():
        ne = ecnt_ref[lvl]                       # edges entering this level
        nn = ncnt_ref[lvl]                       # nodes updated at this level

        hs_ref[...] = jnp.zeros_like(hs_ref)     # segment sums start at zero
        cs_ref[...] = jnp.zeros_like(cs_ref)

        # -- gather child h/c and the parent's packed input projection -------
        def gather_edge(e, carry):
            ci = cidx_ref[lvl, e]
            pg = pglob_ref[lvl, e]
            chb_ref[pl.ds(e, 1), :] = h_ref[pl.ds(ci, 1), :]
            ccb_ref[pl.ds(e, 1), :] = c_ref[pl.ds(ci, 1), :]
            xfb_ref[pl.ds(e, 1), :] = xproj_ref[pl.ds(pg, 1), :]
            return carry
        lax.fori_loop(0, ne, gather_edge, 0)

        # -- batched forget gates (rows >= ne are don't-care) ----------------
        ch = chb_ref[...]
        f = jax.nn.sigmoid(
            xfb_ref[:, 3 * hid:4 * hid]
            + jnp.dot(ch.astype(jnp.bfloat16), u_f_ref[...],
                      preferred_element_type=jnp.float32))
        fcb_ref[...] = f * ccb_ref[...]

        # -- index-driven segment sum over children (no dense one-hot) -------
        def scatter_edge(e, carry):
            pp = ppos_ref[lvl, e]
            hs_ref[pl.ds(pp, 1), :] = (hs_ref[pl.ds(pp, 1), :]
                                       + chb_ref[pl.ds(e, 1), :])
            cs_ref[pl.ds(pp, 1), :] = (cs_ref[pl.ds(pp, 1), :]
                                       + fcb_ref[pl.ds(e, 1), :])
            return carry
        lax.fori_loop(0, ne, scatter_edge, 0)

        # -- gather this level's packed input projections --------------------
        def gather_node(n, carry):
            gi = nidx_ref[lvl, n]
            xpb_ref[pl.ds(n, 1), :] = xproj_ref[pl.ds(gi, 1), :]
            return carry
        lax.fori_loop(0, nn, gather_node, 0)

        # -- lane-dense iou update: one (H,3H) matmul + static lane slices ---
        pre = (xpb_ref[:, 0:3 * hid]
               + jnp.dot(hs_ref[...].astype(jnp.bfloat16), u_iou_ref[...],
                         preferred_element_type=jnp.float32))
        i = jax.nn.sigmoid(pre[:, 0 * hid:1 * hid])
        o = jax.nn.sigmoid(pre[:, 1 * hid:2 * hid])
        u = jnp.tanh(pre[:, 2 * hid:3 * hid])
        c_new = i * u + cs_ref[...]
        cn_ref[...] = c_new
        hn_ref[...] = o * jnp.tanh(c_new)

        # -- scatter updated h/c back into the resident state ----------------
        def scatter_node(n, carry):
            gi = nidx_ref[lvl, n]
            h_ref[pl.ds(gi, 1), :] = hn_ref[pl.ds(n, 1), :]
            c_ref[pl.ds(gi, 1), :] = cn_ref[pl.ds(n, 1), :]
            return carry
        lax.fori_loop(0, nn, scatter_node, 0)


def tree_lstm_layer(xproj, u_iou, u_f, tables, *, hid):
    n_pad = xproj.shape[0]
    num_levels = tables["num_levels"]
    me = tables["max_e_pad"]
    mn = tables["max_n_pad"]

    kern = functools.partial(_tree_layer_kernel, hid=hid)
    grid_spec = pltpu.PrefetchScalarGridSpec(
        num_scalar_prefetch=6,
        grid=(num_levels,),
        in_specs=[pl.BlockSpec((n_pad, 4 * hid), lambda l, *_: (0, 0)),
                  pl.BlockSpec((hid, 3 * hid), lambda l, *_: (0, 0)),
                  pl.BlockSpec((hid, hid), lambda l, *_: (0, 0))],
        out_specs=pl.BlockSpec((n_pad, hid), lambda l, *_: (0, 0)),
        scratch_shapes=[
            pltpu.VMEM((n_pad, hid), jnp.float32),       # resident cell state
            pltpu.VMEM((me, hid), jnp.float32),          # gathered child h
            pltpu.VMEM((me, hid), jnp.float32),          # gathered child c
            pltpu.VMEM((me, 4 * hid), jnp.float32),      # parent xproj rows
            pltpu.VMEM((me, hid), jnp.float32),          # f * child_c
            pltpu.VMEM((mn, hid), jnp.float32),          # h segment sum
            pltpu.VMEM((mn, hid), jnp.float32),          # fc segment sum
            pltpu.VMEM((mn, 4 * hid), jnp.float32),      # node xproj rows
            pltpu.VMEM((mn, hid), jnp.float32),          # new h
            pltpu.VMEM((mn, hid), jnp.float32),          # new c
        ])
    return pl.pallas_call(
        kern,
        out_shape=jax.ShapeDtypeStruct((n_pad, hid), jnp.float32),
        grid_spec=grid_spec,
        compiler_params=pltpu.CompilerParams(
            dimension_semantics=("arbitrary",),          # levels are sequential
            vmem_limit_bytes=32 * 1024 * 1024),
    )(tables["nidx"], tables["cidx"], tables["pglob"], tables["ppos"],
      tables["ncnt"], tables["ecnt"], xproj, u_iou, u_f)


# ---------------------------------------------------------------------------
# Kernel 3: attention + per-tree max pooling + fused VAE head.
#   score -> global softmax -> scale -> per-tree max -> roots @ [Wzm|Wzv] + b
# ---------------------------------------------------------------------------
def _attn_pool_head_kernel(hid_ref, aw_ref, ab_ref, zw_ref, zb_ref, z_ref, *,
                           tree_offsets, tree_sz, b_pad):
    h = hid_ref[...]                                          # (N, H) f32
    # VPU multiply + lane reduce for the width-1 score (no narrow matmul).
    score = jnp.sum(h * aw_ref[...], axis=-1, keepdims=True) + ab_ref[...]
    score = score - jnp.max(score, axis=0, keepdims=True)
    e = jnp.exp(score)
    alpha = e * pl.reciprocal(jnp.sum(e, axis=0, keepdims=True), approx=True)
    scored = h * alpha                                        # (N, H)

    rows = []
    for off, sz in zip(tree_offsets, tree_sz):                # static unroll
        rows.append(jnp.max(scored[off:off + sz, :], axis=0, keepdims=True))
    n_trees = len(tree_sz)
    if b_pad > n_trees:
        rows.append(jnp.zeros((b_pad - n_trees, scored.shape[1]), jnp.float32))
    roots = jnp.concatenate(rows, axis=0)                     # (b_pad, H)

    # Fused VAE head: one packed matmul, one output store.
    z_ref[...] = (jnp.dot(roots.astype(jnp.bfloat16), zw_ref[...],
                          preferred_element_type=jnp.float32) + zb_ref[...])


def attention_pool_head(hidden, att_w, att_b, z_w, z_b, tree_sizes, b_pad):
    out_dim = z_w.shape[1]
    offsets = [0]
    for sz in tree_sizes[:-1]:
        offsets.append(offsets[-1] + int(sz))
    kern = functools.partial(
        _attn_pool_head_kernel,
        tree_offsets=tuple(int(o) for o in offsets),
        tree_sz=tuple(int(s) for s in tree_sizes),
        b_pad=int(b_pad))
    return pl.pallas_call(
        kern,
        out_shape=jax.ShapeDtypeStruct((b_pad, out_dim), jnp.float32),
        in_specs=[_vspec()] * 5,
        out_specs=_vspec(),
        compiler_params=pltpu.CompilerParams(
            vmem_limit_bytes=32 * 1024 * 1024),
    )(hidden, att_w, att_b, z_w, z_b)


# ---------------------------------------------------------------------------
# Host-side: per-level index tables (shared by every TreeLSTM layer).
# ---------------------------------------------------------------------------
def build_level_tables(node_order, adjacency_list, edge_order):
    node_order = np.asarray(node_order)
    adjacency_list = np.asarray(adjacency_list)
    edge_order = np.asarray(edge_order)
    num_levels = int(node_order.max()) + 1

    per_level = []
    max_n, max_e = 1, 1
    for lvl in range(num_levels):
        if lvl == 0:
            nodes = np.zeros((0,), np.int32)       # leaf level needs no tables
            parents = children = ppos = np.zeros((0,), np.int32)
        else:
            nodes = np.where(node_order == lvl)[0].astype(np.int32)
            em = np.where(edge_order == lvl)[0]
            parents = adjacency_list[em, 0].astype(np.int32)
            children = adjacency_list[em, 1].astype(np.int32)
            ppos = np.searchsorted(nodes, parents).astype(np.int32)
            max_n = max(max_n, nodes.shape[0])
            max_e = max(max_e, parents.shape[0])
        per_level.append((nodes, parents, children, ppos))

    def pad_to(a, w):
        out = np.zeros((w,), np.int32)
        out[:a.shape[0]] = a
        return out

    nidx = np.stack([pad_to(n, max_n) for (n, _, _, _) in per_level])
    cidx = np.stack([pad_to(c, max_e) for (_, _, c, _) in per_level])
    pglob = np.stack([pad_to(p, max_e) for (_, p, _, _) in per_level])
    ppos = np.stack([pad_to(q, max_e) for (_, _, _, q) in per_level])
    ncnt = np.array([n.shape[0] for (n, _, _, _) in per_level], np.int32)
    ecnt = np.array([p.shape[0] for (_, p, _, _) in per_level], np.int32)

    return dict(
        num_levels=num_levels,
        max_n_pad=_round_up(max_n, 8),
        max_e_pad=_round_up(max_e, 8),
        nidx=jnp.asarray(nidx), cidx=jnp.asarray(cidx),
        pglob=jnp.asarray(pglob), ppos=jnp.asarray(ppos),
        ncnt=jnp.asarray(ncnt), ecnt=jnp.asarray(ecnt))


# ---------------------------------------------------------------------------
# Forward pass.
# ---------------------------------------------------------------------------
def tree_lstm_encoder_forward(params, inp, *, num_rnn_layers_enc, vae=True):
    node_order = np.asarray(inp["node_order_bottomup"])
    adjacency_list = np.asarray(inp["adjacency_list"])
    edge_order = np.asarray(inp["edge_order_bottomup"])
    tree_sizes = inp["tree_sizes"]
    batch_size = len(tree_sizes)
    total_nodes = node_order.shape[0]
    hid = params["lstm"][0]["u_f"].shape[0]
    latent = params["z_b"].shape[1] // 2

    tables = build_level_tables(node_order, adjacency_list, edge_order)
    n_state_pad = _round_up(total_nodes, 8)

    # Embedding ('ALL' combined layer): plain-JAX gather glue.
    features = jnp.take(params["embedding"],
                        jnp.asarray(inp["features_combined"]), axis=0)

    for layer in range(num_rnn_layers_enc):
        lp = params["lstm"][layer]
        xproj = input_projections(features, lp["w_iouf"], lp["b_iouf"])
        xproj = xproj[:n_state_pad]
        h = tree_lstm_layer(xproj, lp["u_iou"], lp["u_f"], tables, hid=hid)
        # recurrent dropout between layers: identity in eval mode
        features = h

    hidden = features[:total_nodes]                          # strip padding

    b_pad = _round_up(batch_size, 8)
    z_packed = attention_pool_head(hidden, params["att_w"], params["att_b"],
                                   params["z_w"], params["z_b"],
                                   tree_sizes, b_pad)        # (b_pad, 2*latent)
    z_mean = z_packed[:batch_size, :latent]
    z_log_var = z_packed[:batch_size, latent:]
    z = z_mean                                               # eval-mode reparameterize
    if vae:
        kl_loss = 0.5 * jnp.sum(jnp.exp(z_log_var) - z_log_var - 1.0
                                + z_mean * z_mean)
    else:
        kl_loss = jnp.zeros((), jnp.float32)
    return z, kl_loss


# ---------------------------------------------------------------------------
# Deterministic parameter init (weights pre-packed / pre-cast to bf16 once).
# ---------------------------------------------------------------------------
def init_params(key, vocab_size, embedding_dim, hidden, latent, num_layers):
    keys = jax.random.split(key, 1 + 4 * num_layers + 4)
    it = iter(keys)

    def linear(fan_in, shape):
        bound = 1.0 / np.sqrt(fan_in)
        return jax.random.uniform(next(it), shape, jnp.float32, -bound, bound)

    params = {"embedding": jax.random.normal(next(it),
                                             (vocab_size, embedding_dim),
                                             jnp.float32)}
    lstm = []
    for i in range(num_layers):
        din = embedding_dim if i == 0 else hidden
        lstm.append(dict(
            # gate order [i | o | u | f]
            w_iouf=linear(din, (din, 4 * hidden)).astype(jnp.bfloat16),
            b_iouf=linear(din, (1, 4 * hidden)),
            u_iou=linear(hidden, (hidden, 3 * hidden)).astype(jnp.bfloat16),
            u_f=linear(hidden, (hidden, hidden)).astype(jnp.bfloat16),
        ))
    params["lstm"] = lstm
    params["att_w"] = linear(hidden, (1, hidden))            # row layout (VPU)
    params["att_b"] = linear(hidden, (1, 1))
    params["z_w"] = linear(hidden, (hidden, 2 * latent)).astype(jnp.bfloat16)
    params["z_b"] = linear(hidden, (1, 2 * latent))          # [z_mean | z_log_var]
    return params


def build_example(key, vocab_size):
    # Tree 0 (7 nodes, global 0..6): 0 -> {1, 2}, 1 -> {3, 4}, 2 -> {5, 6}
    # Tree 1 (5 nodes, global 7..11): 7 -> {8, 9}, 8 -> {10, 11}
    node_order = np.array([2, 1, 1, 0, 0, 0, 0,
                           2, 1, 0, 0, 0], dtype=np.int32)
    adjacency_list = np.array([[0, 1], [0, 2], [1, 3], [1, 4], [2, 5], [2, 6],
                               [7, 8], [7, 9], [8, 10], [8, 11]], dtype=np.int32)
    edge_order = node_order[adjacency_list[:, 0]]
    tree_sizes = [7, 5]
    total_nodes = node_order.shape[0]
    features_combined = jax.random.randint(key, (total_nodes,), 0, vocab_size,
                                           dtype=jnp.int32)
    return dict(
        node_order_bottomup=node_order,
        adjacency_list=adjacency_list,
        edge_order_bottomup=edge_order,
        tree_sizes=tree_sizes,
        features_combined=features_combined,
    )


if __name__ == "__main__":
    vocab_size = 20
    embedding_dim = 32
    rnn_hidden_size = 32
    latent_dim = 16
    num_rnn_layers_enc = 2

    root_key = jax.random.PRNGKey(0)
    pkey, dkey = jax.random.split(root_key)
    params = init_params(pkey, vocab_size, embedding_dim, rnn_hidden_size,
                         latent_dim, num_rnn_layers_enc)
    inp = build_example(dkey, vocab_size)

    z, kl_loss = tree_lstm_encoder_forward(
        params, inp, num_rnn_layers_enc=num_rnn_layers_enc, vae=True)
    jax.block_until_ready((z, kl_loss))

    assert z.shape == (len(inp["tree_sizes"]), latent_dim)
    assert bool(jnp.all(jnp.isfinite(z))) and bool(jnp.isfinite(kl_loss))
    print("KERNEL_OK")
</pallas_src>

<mosaic_0001>
module attributes {stable_mosaic.version = 11 : i64} {
  func.func @_input_proj_kernel(%arg0: i32, %arg1: memref<16x32xf32, #tpu.memory_space<vmem>>, %arg2: memref<32x128xbf16, #tpu.memory_space<vmem>>, %arg3: memref<1x128xf32, #tpu.memory_space<vmem>>, %arg4: memref<16x128xf32, #tpu.memory_space<vmem>>) attributes {dimension_semantics = [#tpu.dimension_semantics<parallel>], iteration_bounds = array<i64: 1>, scalar_prefetch = 0 : i64, scratch_operands = 0 : i64, tpu.core_type = #tpu.core_type<tc>, window_params = [{transform_indices = @transform_0, window_bounds = array<i64: 16, 32>}, {pipeline_mode = #tpu.pipeline_mode<synchronous>, transform_indices = @transform_1, window_bounds = array<i64: 32, 128>}, {pipeline_mode = #tpu.pipeline_mode<synchronous>, transform_indices = @transform_2, window_bounds = array<i64: 1, 128>}, {transform_indices = @transform_3, window_bounds = array<i64: 16, 128>}]} {
    %c0 = arith.constant 0 : index
    %c0_0 = arith.constant 0 : index
    %0 = vector.load %arg1[%c0, %c0_0] : memref<16x32xf32, #tpu.memory_space<vmem>>, vector<16x32xf32>
    %1 = arith.truncf %0 : vector<16x32xf32> to vector<16x32xbf16>
    %c0_1 = arith.constant 0 : index
    %c0_2 = arith.constant 0 : index
    %2 = vector.load %arg2[%c0_1, %c0_2] : memref<32x128xbf16, #tpu.memory_space<vmem>>, vector<32x128xbf16>
    %cst = arith.constant dense<0.000000e+00> : vector<16x128xf32>
    %3 = tpu.matmul %1, %2, %cst {dimension_numbers = #tpu.dot_dimension_numbers<[1], [0], [0], [1], [0, 0, 1, 1], [], []>} : vector<16x32xbf16>, vector<32x128xbf16>, vector<16x128xf32> -> vector<16x128xf32>
    %c0_3 = arith.constant 0 : index
    %c0_4 = arith.constant 0 : index
    %4 = vector.load %arg3[%c0_3, %c0_4] : memref<1x128xf32, #tpu.memory_space<vmem>>, vector<1x128xf32>
    %5 = vector.broadcast %4 : vector<1x128xf32> to vector<16x128xf32>
    %6 = arith.addf %3, %5 : vector<16x128xf32>
    %c0_5 = arith.constant 0 : index
    %c0_6 = arith.constant 0 : index
    %7 = vector.load %arg4[%c0_5, %c0_6] : memref<16x128xf32, #tpu.memory_space<vmem>>, vector<16x128xf32>
    tpu.vector_store %arg4[%c0_5, %c0_6], %6 {strides = array<i32>} : memref<16x128xf32, #tpu.memory_space<vmem>>, vector<16x128xf32>,
    return
  }
  func.func @transform_0(%arg0: i32) -> (i32, i32) {
    %c0_i32 = arith.constant 0 : i32
    %c0_i32_0 = arith.constant 0 : i32
    return %arg0, %c0_i32 : i32, i32
  }
  func.func @transform_1(%arg0: i32) -> (i32, i32) {
    %c0_i32 = arith.constant 0 : i32
    %c0_i32_0 = arith.constant 0 : i32
    %c0_i32_1 = arith.constant 0 : i32
    return %c0_i32, %c0_i32_0 : i32, i32
  }
  func.func @transform_2(%arg0: i32) -> (i32, i32) {
    %c0_i32 = arith.constant 0 : i32
    %c0_i32_0 = arith.constant 0 : i32
    %c0_i32_1 = arith.constant 0 : i32
    return %c0_i32, %c0_i32_0 : i32, i32
  }
  func.func @transform_3(%arg0: i32) -> (i32, i32) {
    %c0_i32 = arith.constant 0 : i32
    %c0_i32_0 = arith.constant 0 : i32
    return %arg0, %c0_i32 : i32, i32
  }
}

</mosaic_0001>

<llo_original>
// kernel: tpu_custom_call.1
$region0: #{tpu_custom_call.1}
  #allocation0 [shape = 'u32[]', space=smem, size = 0x4, offset = 0x4, fixed_abs, tag = 'smem constant byte address 0x4 - core index']
  #allocation1 [shape = 'u32[144,128]{1,0:T(1,128)}', space=vmem, size = 0x12000, scoped, tag = 'internal scratch']
  %s0 = inlined_call_operand.hbm [shape: f32[16,32], index: 0, kind: input, shape index: {}]
  %s1 = inlined_call_operand.hbm [shape: bf16[32,128], index: 1, kind: input, shape index: {}]
  %s2 = inlined_call_operand.vmem [shape: f32[1,128], index: 2, kind: input, shape index: {}]
  %s3 = inlined_call_operand.hbm [shape: f32[16,128], index: 3, kind: output, shape index: {}]
  %s4 = sld [smem:[#allocation0]]
  $region30: #{tpu_custom_call.1} parent=0
    _
  %s6 = ssub.s32 1, %s4
  %s7 = scalar_select 0, %s6, %s4
  $region1: #{tpu_custom_call.1} parent=0
    #allocation2 [shape = 'u8[8192]{0}', space=vmem, size = 0x2000, scoped, tag = 'input window, operand 0, single buffered']
    #allocation3 [shape = 's32[1]{0}', space=sflag, size = 0x4, scoped, tag = 'scoped memory for tpu_custom_call.1']
    #allocation4 [shape = 's32[1]{0}', space=sflag, size = 0x4, scoped, tag = 'scoped memory for tpu_custom_call.1']
    #allocation5 [shape = 'u8[8192]{0}', space=vmem, size = 0x2000, scoped, tag = 'input window, operand 1, single buffered']
    #allocation6 [shape = 's32[1]{0}', space=sflag, size = 0x4, scoped, tag = 'scoped memory for tpu_custom_call.1']
    #allocation7 [shape = 'u8[8192]{0}', space=vmem, size = 0x2000, scoped, tag = 'output window, operand 0, single buffered']
    %8 = vsyncpa [#allocation3], 0
    %9 = vsyncpa [#allocation6], 0
    %10 = vsyncpa [#allocation4], 0
    // Predicated region
    $region2: #{tpu_custom_call.1} parent=1 // pred_check
      _
    $region3: #{tpu_custom_call.1} parent=1 // pred_check_branch
      %12 = sbr.rel (0) target = $region5
    $region4: #{tpu_custom_call.1} parent=1 // pred_region
      %s14 = ssub.s32 256, 256
      %15 = vsyncadd [#allocation3], %s14
      %s16 = sshll.u32 [#allocation2], 4
      %s17 = int_to_ptr.vmem [resolvable:$true] %s16
      %22 = dma.hbm_to_vmem [thread:$0]  %s0, 256, %s17, [#allocation3], 128, 128, 8
    $region5: #{tpu_custom_call.1} parent=1 // pred_fallthru
      _
    // Predicated region
    $region6: #{tpu_custom_call.1} parent=1 // pred_check
      _
    $region7: #{tpu_custom_call.1} parent=1 // pred_check_branch
      %24 = sbr.rel (0) target = $region9
    $region8: #{tpu_custom_call.1} parent=1 // pred_region
      %s26 = ssub.s32 256, 256
      %27 = vsyncadd [#allocation6], %s26
      %s28 = sshll.u32 [#allocation5], 4
      %s29 = int_to_ptr.vmem [resolvable:$true] %s28
      %34 = dma.hbm_to_vmem [thread:$0]  %s1, 256, %s29, [#allocation6], 64, 64, 4
    $region9: #{tpu_custom_call.1} parent=1 // pred_fallthru
      _
    // Predicated region
    $region10: #{tpu_custom_call.1} parent=1 // pred_check
      _
    $region11: #{tpu_custom_call.1} parent=1 // pred_check_branch
      %36 = sbr.rel (0) target = $region13
    $region12: #{tpu_custom_call.1} parent=1 // pred_region
      _
    $region13: #{tpu_custom_call.1} parent=1 // pred_fallthru
      _
    // Predicated region
    $region14: #{tpu_custom_call.1} parent=1 // pred_check
      _
    $region15: #{tpu_custom_call.1} parent=1 // pred_check_branch
      %38 = sbr.rel (0) target = $region17
    $region16: #{tpu_custom_call.1} parent=1 // pred_region
      %39 = dma.done [#allocation3], 256
    $region17: #{tpu_custom_call.1} parent=1 // pred_fallthru
      _
    // Predicated region
    $region18: #{tpu_custom_call.1} parent=1 // pred_check
      _
    $region19: #{tpu_custom_call.1} parent=1 // pred_check_branch
      %41 = sbr.rel (0) target = $region21
    $region20: #{tpu_custom_call.1} parent=1 // pred_region
      %42 = dma.done [#allocation6], 256
    $region21: #{tpu_custom_call.1} parent=1 // pred_fallthru
      _
    %v44 = vld [vmem:[#allocation2] sm:$0xff]
    %v45 = vld [vmem:[#allocation2 + $0x8] sm:$0xff]
    %v46 = vpack.c.bf16 %v45, %v44
    %v47 = vld [vmem:[#allocation5] sm:$0xf]
    %v48 = vld [vmem:[#allocation5 + $0x4] sm:$0xf]
    %v49 = vld [vmem:[#allocation5 + $0x8] sm:$0xf]
    %v50 = vld [vmem:[#allocation5 + $0xc] sm:$0xf]
    %v51 = vld [vmem:[%s2] sm:$0x1]
    %v53 = vlaneseq
    %v54 = vshrl.u32 %v53, 7
    %v55 = vsub.s32 0, %v54
    %v56 = vrot.slane %v51, %v55
    %v62 = vunpack.c.l.b16 %v47
    %v63 = vunpack.c.l.b16 %v48
    %v64 = vunpack.c.l.b16 %v49
    %v65 = vunpack.c.l.b16 %v50
    %v66 = vpack.c.b16 %v63, %v62
    %v67 = vpack.c.b16 %v65, %v64
    %vm70 = vcmask 261120
    %v72 = vsel %vm70, %v46, 0
    %74 = vmatprep.subr.bf16.mxu0 0
    %75 = vmatpush1.bf16.msra.mxu0 %v66
    %76 = vmatprep.subr.bf16.mxu0 0
    %77 = vmatpush1.bf16.msra.mxu0 %v67
    %78 = vmatprep.subr.bf16.mxu0 0
    %79 = vmatpush1.bf16.msra.mxu0 0
    %80 = vmatprep.subr.bf16.mxu0 0
    %81 = vmatpush1.bf16.msra.mxu0 0
    %82 = vmatprep.subr.bf16.mxu0 0
    %83 = vmatpush1.bf16.msra.mxu0 0
    %84 = vmatprep.subr.bf16.mxu0 0
    %85 = vmatpush1.bf16.msra.mxu0 0
    %86 = vmatprep.subr.bf16.mxu0 0
    %87 = vmatpush1.bf16.msra.mxu0 0
    %88 = vmatprep.subr.bf16.mxu0 0
    %89 = vmatpush1.bf16.msra.mxu0 0
    %90 = vmatprep.subr.bf16.mxu0 0
    %91 = vmatpush1.bf16.msra.mxu0 0
    %92 = vmatprep.subr.bf16.mxu0 0
    %93 = vmatpush1.bf16.msra.mxu0 0
    %94 = vmatprep.subr.bf16.mxu0 0
    %95 = vmatpush1.bf16.msra.mxu0 0
    %96 = vmatprep.subr.bf16.mxu0 0
    %97 = vmatpush1.bf16.msra.mxu0 0
    %98 = vmatprep.subr.bf16.mxu0 0
    %99 = vmatpush1.bf16.msra.mxu0 0
    %100 = vmatprep.subr.bf16.mxu0 0
    %101 = vmatpush1.bf16.msra.mxu0 0
    %102 = vmatprep.subr.bf16.mxu0 0
    %103 = vmatpush1.bf16.msra.mxu0 0
    %104 = vmatprep.subr.bf16.mxu0 0
    %105 = vmatpush1.bf16.msra.mxu0 0
    %106 = vmatprep.mubr.bf16.mxu0 0
    %107 = vmatmul.mubr.bf16.gmra.mrb[0].mxu0 %v72
    %v108 = vpop.f32.mrb[0].mxu0
    %v109 = vadd.f32 %v56, %v108
    %v110 = vpop.f32.mrb[0].mxu0
    %v111 = vpop.f32.mrb[0].mxu0
    %v112 = vadd.f32 %v56, %v111
    %v113 = vpop.f32.mrb[0].mxu0
    %114 = vdwg.mxu0
    %115 = vst [vmem:[#allocation7] sm:$0xff] %v109
    %116 = vst [vmem:[#allocation7 + $0x8] sm:$0xff] %v112
    // Predicated region
    $region22: #{tpu_custom_call.1} parent=1 // pred_check
      _
    $region23: #{tpu_custom_call.1} parent=1 // pred_check_branch
      %118 = sbr.rel (0) target = $region25
    $region24: #{tpu_custom_call.1} parent=1 // pred_region
      %s120 = ssub.s32 256, 256
      %121 = vsyncadd [#allocation4], %s120
      %s122 = sshll.u32 [#allocation7], 4
      %s123 = int_to_ptr.vmem [resolvable:$true] %s122
      %128 = dma.vmem_to_hbm [thread:$0]  %s123, 256, %s3, [#allocation4], 128, 128, 8
    $region25: #{tpu_custom_call.1} parent=1 // pred_fallthru
      _
    // Predicated region
    $region26: #{tpu_custom_call.1} parent=1 // pred_check
      _
    $region27: #{tpu_custom_call.1} parent=1 // pred_check_branch
      %130 = sbr.rel (0) target = $region29
    $region28: #{tpu_custom_call.1} parent=1 // pred_region
      %131 = dma.done [#allocation4], 256
    $region29: #{tpu_custom_call.1} parent=1 // pred_fallthru
      _
    %132 = vsyncpa [#allocation3], 1
    %133 = vsyncpa [#allocation6], 1
    %134 = vsyncpa [#allocation4], 1

</llo_original>
